<compile_context>
chip_gen: v7x
topology: tpu7x:2x2x1
jax: 0.10.0
libtpu: 0.0.40
codegen_flags: <defaults>
</compile_context>

<pallas_src>
import functools

import jax
import jax.numpy as jnp
import numpy as np
from jax import lax
from jax.experimental import pallas as pl
from jax.experimental.pallas import tpu as pltpu

EPS = 1e-5          # nn.LayerNorm default eps
NEG_INF = -1e30     # stands in for masked_fill(-inf); exp underflows to exactly 0


def _round_up(x, m):
    return (x + m - 1) // m * m


def _row_tile(n, cap=512):
    """Largest row tile that is a multiple of 8, <= cap and divides round_up(n, 8)."""
    npad = _round_up(n, 8)
    tile, t = 8, 8
    while t <= min(cap, npad):
        if npad % t == 0:
            tile = t
        t += 8
    return tile, npad


# ------------------------------------------------------------------ pltpu.roll direction probe

_ROLL_MODE = None


def _probe_roll():
    """Returns (use_roll, flip): how to realize a circular LEFT lane-shift with pltpu.roll.
    Falls back to a zero-fill shift (VALU) path if roll is unavailable or behaves unexpectedly."""
    global _ROLL_MODE
    if _ROLL_MODE is not None:
        return _ROLL_MODE

    def k(x_ref, o_ref):
        o_ref[...] = pltpu.roll(x_ref[...], 3, 1)

    try:
        x = jnp.arange(8 * 128, dtype=jnp.float32).reshape(8, 128)
        y = np.asarray(pl.pallas_call(
            k, out_shape=jax.ShapeDtypeStruct((8, 128), jnp.float32))(x))
        xn = np.asarray(x)
        if np.array_equal(y, np.roll(xn, 3, axis=1)):
            _ROLL_MODE = (True, False)   # jnp.roll convention: left-shift s == roll by (W - s)
        elif np.array_equal(y, np.roll(xn, -3, axis=1)):
            _ROLL_MODE = (True, True)    # opposite convention: left-shift s == roll by s
        else:
            _ROLL_MODE = (False, False)
    except Exception:
        _ROLL_MODE = (False, False)
    return _ROLL_MODE


# ----------------------------------------------------------------------------- kernels

def ln_matmul_kernel(x_ref, g_ref, b_ref, w_ref, o_ref):
    """LayerNorm over last dim, then bf16 MXU matmul (QKV projection, bias=False)."""
    x = x_ref[...]
    mu = jnp.mean(x, axis=-1, keepdims=True)
    var = jnp.mean(jnp.square(x - mu), axis=-1, keepdims=True)
    y = (x - mu) * lax.rsqrt(var + EPS) * g_ref[...] + b_ref[...]
    o_ref[...] = jnp.dot(y.astype(jnp.bfloat16), w_ref[...],
                         preferred_element_type=jnp.float32).astype(o_ref.dtype)


def _rel_shift_wide(p_pre, t, wp, use_roll, flip):
    """Transformer-XL _rel_shift on a [T, T] f32 tile, entirely in VMEM.
    rel_shift(P)[r, c] = Pwide[r, (T-1-r) + c],  Pwide = [ P | 0-col | P shifted up 1 row | pad ].
    The per-row left shift s_r = T-1-r is realized with log2(T) uniform lane shifts (XLU roll when
    available) selected per row from the bits of s_r.  The kept region [:, :T] only reads columns
    <= 2T-2 < wp, so circular rolls and zero-filled shifts are interchangeable here."""
    p_up = jnp.concatenate([p_pre[1:, :], jnp.zeros((1, t), jnp.float32)], axis=0)
    pieces = [p_pre, jnp.zeros((t, 1), jnp.float32), p_up]
    pad_w = wp - (2 * t + 1)
    if pad_w:
        pieces.append(jnp.zeros((t, pad_w), jnp.float32))
    acc = jnp.concatenate(pieces, axis=1)                                  # [T, Wp]
    shift = (t - 1) - lax.broadcasted_iota(jnp.int32, (t, 1), 0)           # s_r
    for nb in range(max(1, (t - 1).bit_length())):
        step = 1 << nb
        if use_roll:
            shifted = pltpu.roll(acc, step if flip else wp - step, 1)      # XLU circular left shift
        else:
            shifted = jnp.concatenate(
                [acc[:, step:], jnp.zeros((t, step), jnp.float32)], axis=1)  # VALU fallback
        acc = jnp.where((shift & step) != 0, shifted, acc)
    return acc[:, :t]


def fused_attn_kernel(qkv_ref, rwb_ref, remb_ref, rbias_ref, mask_ref, wo_ref, res_ref,
                      o_ref, *, nheads, dh, t, wp, use_roll, flip):
    """One batch element: all heads' relative attention fused, then a single
    [T, H*Dh] @ [H*Dh, D] output projection + residual.  The 1/sqrt(d_head) scale is
    pre-folded into q (via W_qkv's Q columns), r_w_bias and r_bias on the host."""
    qkv = qkv_ref[0]                           # [T, 3*H*Dh] bf16 (lane-dense)
    mask_bad = mask_ref[0] > 0.0               # [1, T] (True = padded key)
    dn = (((1,), (1,)), ((), ()))              # a @ b^T without explicit transpose

    ctx_heads = []
    for hh in range(nheads):
        q = qkv[:, hh * dh:(hh + 1) * dh]                                   # [T, Dh] (scaled)
        k = qkv[:, (nheads + hh) * dh:(nheads + hh + 1) * dh]
        v = qkv[:, (2 * nheads + hh) * dh:(2 * nheads + hh + 1) * dh]

        ac = lax.dot_general(q + rwb_ref[hh], k, dn,
                             preferred_element_type=jnp.float32)            # [T, T]
        b_ = lax.dot_general(q, remb_ref[hh], dn,
                             preferred_element_type=jnp.float32)            # [T, T]
        bd = _rel_shift_wide(b_ + rbias_ref[hh], t, wp, use_roll, flip)     # [T, T]

        s = jnp.where(mask_bad, NEG_INF, ac + bd)                           # f32 scores
        m = jnp.max(s, axis=-1, keepdims=True)
        e = jnp.exp(s - m)
        denom = jnp.sum(e, axis=-1, keepdims=True)
        ctx = jnp.dot(e.astype(jnp.bfloat16), v,
                      preferred_element_type=jnp.float32)                   # [T, Dh]
        ctx_heads.append(ctx * pl.reciprocal(denom, approx=True))           # normalize after @V

    ctx_all = jnp.concatenate(ctx_heads, axis=-1).astype(jnp.bfloat16)      # [T, H*Dh]
    out = jnp.dot(ctx_all, wo_ref[...], preferred_element_type=jnp.float32)  # [T, D]
    o_ref[0] = res_ref[0] + out
    # TODO(synk): for production T add a key-tile grid axis with flash-style online softmax
    # (bounds the [T, Wp]/[T, T] working set for v7x's 64 MiB VMEM), a parallel query-tile axis to
    # feed both v7x TensorCores, and d_ff tiling of W1/W2 for very large FFNs.


def ffn_kernel(x_ref, g_ref, b_ref, w1_ref, b1_ref, w2_ref, b2_ref, o_ref):
    """LayerNorm -> W1 + b1 -> relu -> W2 + b2 -> residual add (bf16 MXU operands, f32 accum)."""
    x = x_ref[...]
    mu = jnp.mean(x, axis=-1, keepdims=True)
    var = jnp.mean(jnp.square(x - mu), axis=-1, keepdims=True)
    y = (x - mu) * lax.rsqrt(var + EPS) * g_ref[...] + b_ref[...]
    h = jnp.dot(y.astype(jnp.bfloat16), w1_ref[...],
                preferred_element_type=jnp.float32) + b1_ref[...]
    h = jnp.maximum(h, 0.0)
    out = jnp.dot(h.astype(jnp.bfloat16), w2_ref[...],
                  preferred_element_type=jnp.float32) + b2_ref[...]
    o_ref[...] = out + x


# ----------------------------------------------------------------------------- wrappers

def ln_qkv(x2d, g, b, w_bf16):
    n, d = x2d.shape
    dout = w_bf16.shape[1]
    tile, npad = _row_tile(n)
    xp = jnp.pad(x2d, ((0, npad - n), (0, 0))) if npad != n else x2d
    out = pl.pallas_call(
        ln_matmul_kernel,
        out_shape=jax.ShapeDtypeStruct((npad, dout), jnp.bfloat16),
        grid=(npad // tile,),
        in_specs=[pl.BlockSpec((tile, d), lambda i: (i, 0)),
                  pl.BlockSpec((1, d), lambda i: (0, 0)),
                  pl.BlockSpec((1, d), lambda i: (0, 0)),
                  pl.BlockSpec((d, dout), lambda i: (0, 0))],
        out_specs=pl.BlockSpec((tile, dout), lambda i: (i, 0)),
        compiler_params=pltpu.CompilerParams(dimension_semantics=("parallel",)),
    )(xp, g.reshape(1, d), b.reshape(1, d), w_bf16)
    return out[:n] if npad != n else out


def fused_rel_attention(qkv, r_w_bias_s, r_emb, r_bias_s, attn_mask, w_o, residual):
    """qkv: [B, T, 3*H*Dh] bf16 (Q pre-scaled); r_w_bias_s: [H, Dh] pre-scaled;
    r_emb: [T, H, Dh]; r_bias_s: [T, H] pre-scaled; attn_mask: bool [B, T] (True = pad);
    w_o: [H*Dh, D]; residual: [B, T, D] f32.  Returns residual + attention output, [B, T, D]."""
    b, t, _ = qkv.shape
    h, dh = r_w_bias_s.shape
    d = residual.shape[-1]
    wp = max(_round_up(2 * t + 1, 128), 128)         # lane-aligned width of the rel_shift slab
    use_roll, flip = _probe_roll()

    rwb = r_w_bias_s.reshape(h, 1, dh).astype(jnp.bfloat16)
    remb = jnp.transpose(r_emb, (1, 0, 2)).astype(jnp.bfloat16)     # [H, T, Dh]  (tiny)
    rbias = jnp.transpose(r_bias_s, (1, 0)).reshape(h, 1, t)        # [H, 1, T]   f32
    wo = w_o.astype(jnp.bfloat16)                                   # [H*Dh, D]
    mask = attn_mask.astype(jnp.float32).reshape(b, 1, t)           # [B, 1, T]

    kern = functools.partial(fused_attn_kernel, nheads=h, dh=dh, t=t, wp=wp,
                             use_roll=use_roll, flip=flip)
    return pl.pallas_call(
        kern,
        out_shape=jax.ShapeDtypeStruct((b, t, d), jnp.float32),
        grid=(b,),
        in_specs=[
            pl.BlockSpec((1, t, 3 * h * dh), lambda i: (i, 0, 0)),   # qkv (bf16, lane-dense)
            pl.BlockSpec((h, 1, dh), lambda i: (0, 0, 0)),           # r_w_bias (all heads)
            pl.BlockSpec((h, t, dh), lambda i: (0, 0, 0)),           # r_emb
            pl.BlockSpec((h, 1, t), lambda i: (0, 0, 0)),            # r_bias
            pl.BlockSpec((1, 1, t), lambda i: (i, 0, 0)),            # pad mask (per batch)
            pl.BlockSpec((h * dh, d), lambda i: (0, 0)),             # W_o (one K=H*Dh matmul)
            pl.BlockSpec((1, t, d), lambda i: (i, 0, 0)),            # residual
        ],
        out_specs=pl.BlockSpec((1, t, d), lambda i: (i, 0, 0)),      # lane-dense [T, D] per batch
        compiler_params=pltpu.CompilerParams(dimension_semantics=("parallel",)),
    )(qkv, rwb, remb, rbias, mask, wo, residual)


def ffn_block(x2d, g, b, w1_bf16, b1, w2_bf16, b2):
    n, d = x2d.shape
    dff = w1_bf16.shape[1]
    tile, npad = _row_tile(n)
    xp = jnp.pad(x2d, ((0, npad - n), (0, 0))) if npad != n else x2d
    out = pl.pallas_call(
        ffn_kernel,
        out_shape=jax.ShapeDtypeStruct((npad, d), jnp.float32),
        grid=(npad // tile,),
        in_specs=[pl.BlockSpec((tile, d), lambda i: (i, 0)),
                  pl.BlockSpec((1, d), lambda i: (0, 0)),
                  pl.BlockSpec((1, d), lambda i: (0, 0)),
                  pl.BlockSpec((d, dff), lambda i: (0, 0)),
                  pl.BlockSpec((1, dff), lambda i: (0, 0)),
                  pl.BlockSpec((dff, d), lambda i: (0, 0)),
                  pl.BlockSpec((1, d), lambda i: (0, 0))],
        out_specs=pl.BlockSpec((tile, d), lambda i: (i, 0)),
        compiler_params=pltpu.CompilerParams(dimension_semantics=("parallel",)),
    )(xp, g.reshape(1, d), b.reshape(1, d), w1_bf16, b1.reshape(1, dff), w2_bf16, b2.reshape(1, d))
    return out[:n] if npad != n else out


# ----------------------------------------------------------------------------- glue

def distance_encoder_layer_forward(x, attn_mask, p):
    """x: [T, B, D] float32, attn_mask: bool [B, T] (True = padded key)."""
    t, b, d = x.shape
    h, dh = p["r_w_bias"].shape
    n = b * t
    scale = 1.0 / (dh ** 0.5)

    x_bt = jnp.transpose(x, (1, 0, 2))                      # [B, T, D] internal layout
    x2d = x_bt.reshape(n, d)

    # ---- self-attention block: LayerNorm + QKV projection (scale folded into Q columns) ----
    w_qkv_s = p["w_qkv"].at[:, :h * dh].multiply(scale).astype(jnp.bfloat16)
    qkv2d = ln_qkv(x2d, p["ln1_g"], p["ln1_b"], w_qkv_s)    # [N, 3*H*Dh] bf16
    qkv = qkv2d.reshape(b, t, 3 * h * dh)                   # free reshape, no HBM transpose

    x1_bt = fused_rel_attention(qkv,
                                p["r_w_bias"] * scale,
                                p["r_emb"][-t:],
                                p["r_bias"][-t:] * scale,
                                attn_mask, p["w_o"], x_bt)  # [B, T, D] = x + attn_out

    # ---- feed-forward block ----
    out2d = ffn_block(x1_bt.reshape(n, d), p["ln2_g"], p["ln2_b"],
                      p["w_1"].astype(jnp.bfloat16), p["b_1"],
                      p["w_2"].astype(jnp.bfloat16), p["b_2"])       # [N, D]
    return jnp.transpose(out2d.reshape(b, t, d), (1, 0, 2))          # back to [T, B, D]


# ----------------------------------------------------------------------------- reference (plain JAX)

def rel_shift_ref(x):  # x: [q, k, B, H]
    ql, kl, b, n = x.shape
    zp = jnp.zeros((ql, 1, b, n), x.dtype)
    xp = jnp.concatenate([zp, x], axis=1).reshape(kl + 1, ql, b, n)
    return xp[1:].reshape(ql, kl, b, n)


def reference_forward(x, attn_mask, p):
    t, b, d = x.shape
    h, dh = p["r_w_bias"].shape

    def ln(v, g, bta):
        mu = v.mean(-1, keepdims=True)
        var = ((v - mu) ** 2).mean(-1, keepdims=True)
        return (v - mu) / jnp.sqrt(var + EPS) * g + bta

    q_in = ln(x, p["ln1_g"], p["ln1_b"])
    heads = (q_in @ p["w_qkv"]).reshape(t, b, 3, h, dh)
    q, k, v = heads[:, :, 0], heads[:, :, 1], heads[:, :, 2]
    r_emb, r_bias = p["r_emb"][-t:], p["r_bias"][-t:]
    rwq = q + p["r_w_bias"][None, None]
    ac = jnp.einsum("ibnd,jbnd->ijbn", rwq, k)
    b_ = jnp.einsum("ibnd,jnd->ijbn", q, r_emb)
    bd = rel_shift_ref(b_ + r_bias[None, :, None, :])
    s = (ac + bd) * (1.0 / dh ** 0.5)
    s = jnp.where(jnp.transpose(attn_mask)[None, :, :, None], NEG_INF, s)
    pr = jax.nn.softmax(s, axis=1)
    av = jnp.einsum("ijbn,jbnd->ibnd", pr, v)
    x1 = x + av.reshape(t, b, h * dh) @ p["w_o"]
    y = ln(x1, p["ln2_g"], p["ln2_b"])
    y = jnp.maximum(y @ p["w_1"] + p["b_1"], 0.0) @ p["w_2"] + p["b_2"]
    return x1 + y


# ----------------------------------------------------------------------------- main

def init_params(key, d_model, h, d_ff, max_len):
    d_head = d_model // h
    ks = jax.random.split(key, 9)
    nrm = lambda k, shape, s: jax.random.normal(k, shape, jnp.float32) * s
    return dict(
        ln1_g=jnp.ones((d_model,), jnp.float32), ln1_b=jnp.zeros((d_model,), jnp.float32),
        ln2_g=jnp.ones((d_model,), jnp.float32), ln2_b=jnp.zeros((d_model,), jnp.float32),
        w_qkv=nrm(ks[0], (d_model, 3 * h * d_head), 0.05),   # qkv_net (bias=False)
        w_o=nrm(ks[1], (h * d_head, d_model), 0.05),         # o_net   (bias=False)
        r_emb=nrm(ks[2], (max_len, h, d_head), 0.05),
        r_w_bias=nrm(ks[3], (h, d_head), 0.05),
        r_bias=nrm(ks[4], (max_len, h), 0.05),
        w_1=nrm(ks[5], (d_model, d_ff), 0.05), b_1=nrm(ks[6], (d_ff,), 0.02),
        w_2=nrm(ks[7], (d_ff, d_model), 0.05), b_2=nrm(ks[8], (d_model,), 0.02),
    )


if __name__ == "__main__":
    T, B, D, H, D_FF, MAX_LEN = 8, 2, 32, 4, 64, 64

    root = jax.random.PRNGKey(0)
    k_par, k_x = jax.random.split(root)
    params = init_params(k_par, D, H, D_FF, MAX_LEN)

    x = jax.random.normal(k_x, (T, B, D), jnp.float32)                 # [T, B, D] time-major
    attn_mask = jnp.zeros((B, T), dtype=bool).at[1, T - 2:].set(True)  # pad last 2 keys of batch 1

    out = distance_encoder_layer_forward(x, attn_mask, params)
    out = jax.block_until_ready(out)
    assert out.shape == (T, B, D)

    with jax.default_matmul_precision("highest"):
        ref = jax.block_until_ready(reference_forward(x, attn_mask, params))
    np.testing.assert_allclose(np.asarray(out), np.asarray(ref), rtol=2e-2, atol=2e-2)

    print("KERNEL_OK")
</pallas_src>

<mosaic_0001>
module attributes {stable_mosaic.version = 11 : i64} {
  func.func @ln_matmul_kernel(%arg0: i32, %arg1: memref<16x32xf32, #tpu.memory_space<vmem>>, %arg2: memref<1x32xf32, #tpu.memory_space<vmem>>, %arg3: memref<1x32xf32, #tpu.memory_space<vmem>>, %arg4: memref<32x96xbf16, #tpu.memory_space<vmem>>, %arg5: memref<16x96xbf16, #tpu.memory_space<vmem>>) attributes {dimension_semantics = [#tpu.dimension_semantics<parallel>], iteration_bounds = array<i64: 1>, scalar_prefetch = 0 : i64, scratch_operands = 0 : i64, tpu.core_type = #tpu.core_type<tc>, window_params = [{transform_indices = @transform_0, window_bounds = array<i64: 16, 32>}, {pipeline_mode = #tpu.pipeline_mode<synchronous>, transform_indices = @transform_1, window_bounds = array<i64: 1, 32>}, {pipeline_mode = #tpu.pipeline_mode<synchronous>, transform_indices = @transform_2, window_bounds = array<i64: 1, 32>}, {pipeline_mode = #tpu.pipeline_mode<synchronous>, transform_indices = @transform_3, window_bounds = array<i64: 32, 96>}, {transform_indices = @transform_4, window_bounds = array<i64: 16, 96>}]} {
    %c0 = arith.constant 0 : index
    %c0_0 = arith.constant 0 : index
    %0 = vector.load %arg1[%c0, %c0_0] : memref<16x32xf32, #tpu.memory_space<vmem>>, vector<16x32xf32>
    %cst = arith.constant dense<0.000000e+00> : vector<16xf32>
    %1 = vector.multi_reduction <add>, %0, %cst [1] : vector<16x32xf32> to vector<16xf32>
    %2 = vector.shape_cast %1 : vector<16xf32> to vector<16x1xf32>
    %cst_1 = arith.constant 3.200000e+01 : f32
    %3 = vector.broadcast %cst_1 : f32 to vector<16x1xf32>
    %4 = arith.divf %2, %3 : vector<16x1xf32>
    %5 = vector.broadcast %4 : vector<16x1xf32> to vector<16x32xf32>
    %6 = arith.subf %0, %5 : vector<16x32xf32>
    %7 = arith.mulf %6, %6 : vector<16x32xf32>
    %cst_2 = arith.constant dense<0.000000e+00> : vector<16xf32>
    %8 = vector.multi_reduction <add>, %7, %cst_2 [1] : vector<16x32xf32> to vector<16xf32>
    %9 = vector.shape_cast %8 : vector<16xf32> to vector<16x1xf32>
    %cst_3 = arith.constant 3.200000e+01 : f32
    %10 = vector.broadcast %cst_3 : f32 to vector<16x1xf32>
    %11 = arith.divf %9, %10 : vector<16x1xf32>
    %12 = vector.broadcast %4 : vector<16x1xf32> to vector<16x32xf32>
    %13 = arith.subf %0, %12 : vector<16x32xf32>
    %cst_4 = arith.constant 9.99999974E-6 : f32
    %14 = vector.broadcast %cst_4 : f32 to vector<16x1xf32>
    %15 = arith.addf %11, %14 : vector<16x1xf32>
    %16 = math.rsqrt %15 : vector<16x1xf32>
    %17 = vector.broadcast %16 : vector<16x1xf32> to vector<16x32xf32>
    %18 = arith.mulf %13, %17 : vector<16x32xf32>
    %c0_5 = arith.constant 0 : index
    %c0_6 = arith.constant 0 : index
    %19 = vector.load %arg2[%c0_5, %c0_6] : memref<1x32xf32, #tpu.memory_space<vmem>>, vector<1x32xf32>
    %20 = vector.broadcast %19 : vector<1x32xf32> to vector<16x32xf32>
    %21 = arith.mulf %18, %20 : vector<16x32xf32>
    %c0_7 = arith.constant 0 : index
    %c0_8 = arith.constant 0 : index
    %22 = vector.load %arg3[%c0_7, %c0_8] : memref<1x32xf32, #tpu.memory_space<vmem>>, vector<1x32xf32>
    %23 = vector.broadcast %22 : vector<1x32xf32> to vector<16x32xf32>
    %24 = arith.addf %21, %23 : vector<16x32xf32>
    %25 = arith.truncf %24 : vector<16x32xf32> to vector<16x32xbf16>
    %c0_9 = arith.constant 0 : index
    %c0_10 = arith.constant 0 : index
    %26 = vector.load %arg4[%c0_9, %c0_10] : memref<32x96xbf16, #tpu.memory_space<vmem>>, vector<32x96xbf16>
    %cst_11 = arith.constant dense<0.000000e+00> : vector<16x96xf32>
    %27 = tpu.matmul %25, %26, %cst_11 {dimension_numbers = #tpu.dot_dimension_numbers<[1], [0], [0], [1], [0, 0, 1, 1], [], []>} : vector<16x32xbf16>, vector<32x96xbf16>, vector<16x96xf32> -> vector<16x96xf32>
    %28 = arith.truncf %27 : vector<16x96xf32> to vector<16x96xbf16>
    %c0_12 = arith.constant 0 : index
    %c0_13 = arith.constant 0 : index
    %29 = vector.load %arg5[%c0_12, %c0_13] : memref<16x96xbf16, #tpu.memory_space<vmem>>, vector<16x96xbf16>
    tpu.vector_store %arg5[%c0_12, %c0_13], %28 {strides = array<i32>} : memref<16x96xbf16, #tpu.memory_space<vmem>>, vector<16x96xbf16>,
    return
  }
  func.func @transform_0(%arg0: i32) -> (i32, i32) {
    %c0_i32 = arith.constant 0 : i32
    %c0_i32_0 = arith.constant 0 : i32
    return %arg0, %c0_i32 : i32, i32
  }
  func.func @transform_1(%arg0: i32) -> (i32, i32) {
    %c0_i32 = arith.constant 0 : i32
    %c0_i32_0 = arith.constant 0 : i32
    %c0_i32_1 = arith.constant 0 : i32
    return %c0_i32, %c0_i32_0 : i32, i32
  }
  func.func @transform_2(%arg0: i32) -> (i32, i32) {
    %c0_i32 = arith.constant 0 : i32
    %c0_i32_0 = arith.constant 0 : i32
    %c0_i32_1 = arith.constant 0 : i32
    return %c0_i32, %c0_i32_0 : i32, i32
  }
  func.func @transform_3(%arg0: i32) -> (i32, i32) {
    %c0_i32 = arith.constant 0 : i32
    %c0_i32_0 = arith.constant 0 : i32
    %c0_i32_1 = arith.constant 0 : i32
    return %c0_i32, %c0_i32_0 : i32, i32
  }
  func.func @transform_4(%arg0: i32) -> (i32, i32) {
    %c0_i32 = arith.constant 0 : i32
    %c0_i32_0 = arith.constant 0 : i32
    return %arg0, %c0_i32 : i32, i32
  }
}

</mosaic_0001>

<llo_original>
// kernel: tpu_custom_call.1
$region0: #{tpu_custom_call.1}
  #allocation0 [shape = 'u32[]', space=smem, size = 0x4, offset = 0x4, fixed_abs, tag = 'smem constant byte address 0x4 - core index']
  #allocation1 [shape = 'u32[144,128]{1,0:T(1,128)}', space=vmem, size = 0x12000, scoped, tag = 'internal scratch']
  %s0 = inlined_call_operand.hbm [shape: f32[16,32], index: 0, kind: input, shape index: {}]
  %s1 = inlined_call_operand.vmem [shape: f32[1,32], index: 1, kind: input, shape index: {}]
  %s2 = inlined_call_operand.vmem [shape: f32[1,32], index: 2, kind: input, shape index: {}]
  %s3 = inlined_call_operand.hbm [shape: bf16[32,96], index: 3, kind: input, shape index: {}]
  %s4 = inlined_call_operand.hbm [shape: bf16[16,96], index: 4, kind: output, shape index: {}]
  %s5 = sld [smem:[#allocation0]]
  $region34: #{tpu_custom_call.1} parent=0
    _
  %s7 = ssub.s32 1, %s5
  %s8 = scalar_select 0, %s7, %s5
  $region1: #{tpu_custom_call.1} parent=0
    #allocation2 [shape = 'u8[8192]{0}', space=vmem, size = 0x2000, scoped, tag = 'input window, operand 0, single buffered']
    #allocation3 [shape = 's32[1]{0}', space=sflag, size = 0x4, scoped, tag = 'scoped memory for tpu_custom_call.1']
    #allocation4 [shape = 's32[1]{0}', space=sflag, size = 0x4, scoped, tag = 'scoped memory for tpu_custom_call.1']
    #allocation5 [shape = 'u8[8192]{0}', space=vmem, size = 0x2000, scoped, tag = 'input window, operand 3, single buffered']
    #allocation6 [shape = 's32[1]{0}', space=sflag, size = 0x4, scoped, tag = 'scoped memory for tpu_custom_call.1']
    #allocation7 [shape = 'u8[4096]{0}', space=vmem, size = 0x1000, scoped, tag = 'output window, operand 0, single buffered']
    %9 = vsyncpa [#allocation3], 0
    %10 = vsyncpa [#allocation6], 0
    %11 = vsyncpa [#allocation4], 0
    // Predicated region
    $region2: #{tpu_custom_call.1} parent=1 // pred_check
      _
    $region3: #{tpu_custom_call.1} parent=1 // pred_check_branch
      %13 = sbr.rel (0) target = $region5
    $region4: #{tpu_custom_call.1} parent=1 // pred_region
      %s15 = ssub.s32 256, 256
      %16 = vsyncadd [#allocation3], %s15
      %s17 = sshll.u32 [#allocation2], 4
      %s18 = int_to_ptr.vmem [resolvable:$true] %s17
      %23 = dma.hbm_to_vmem [thread:$0]  %s0, 256, %s18, [#allocation3], 128, 128, 8
    $region5: #{tpu_custom_call.1} parent=1 // pred_fallthru
      _
    // Predicated region
    $region6: #{tpu_custom_call.1} parent=1 // pred_check
      _
    $region7: #{tpu_custom_call.1} parent=1 // pred_check_branch
      %25 = sbr.rel (0) target = $region9
    $region8: #{tpu_custom_call.1} parent=1 // pred_region
      _
    $region9: #{tpu_custom_call.1} parent=1 // pred_fallthru
      _
    // Predicated region
    $region10: #{tpu_custom_call.1} parent=1 // pred_check
      _
    $region11: #{tpu_custom_call.1} parent=1 // pred_check_branch
      %27 = sbr.rel (0) target = $region13
    $region12: #{tpu_custom_call.1} parent=1 // pred_region
      _
    $region13: #{tpu_custom_call.1} parent=1 // pred_fallthru
      _
    // Predicated region
    $region14: #{tpu_custom_call.1} parent=1 // pred_check
      _
    $region15: #{tpu_custom_call.1} parent=1 // pred_check_branch
      %29 = sbr.rel (0) target = $region17
    $region16: #{tpu_custom_call.1} parent=1 // pred_region
      %s31 = ssub.s32 256, 256
      %32 = vsyncadd [#allocation6], %s31
      %s33 = sshll.u32 [#allocation5], 4
      %s34 = int_to_ptr.vmem [resolvable:$true] %s33
      %39 = dma.hbm_to_vmem [thread:$0]  %s3, 256, %s34, [#allocation6], 64, 64, 4
    $region17: #{tpu_custom_call.1} parent=1 // pred_fallthru
      _
    // Predicated region
    $region18: #{tpu_custom_call.1} parent=1 // pred_check
      _
    $region19: #{tpu_custom_call.1} parent=1 // pred_check_branch
      %41 = sbr.rel (0) target = $region21
    $region20: #{tpu_custom_call.1} parent=1 // pred_region
      %42 = dma.done [#allocation3], 256
    $region21: #{tpu_custom_call.1} parent=1 // pred_fallthru
      _
    // Predicated region
    $region22: #{tpu_custom_call.1} parent=1 // pred_check
      _
    $region23: #{tpu_custom_call.1} parent=1 // pred_check_branch
      %44 = sbr.rel (0) target = $region25
    $region24: #{tpu_custom_call.1} parent=1 // pred_region
      %45 = dma.done [#allocation6], 256
    $region25: #{tpu_custom_call.1} parent=1 // pred_fallthru
      _
    %v47 = vld [vmem:[#allocation2] sm:$0xff]
    %v48 = vld [vmem:[#allocation2 + $0x8] sm:$0xff]
    %vm49 = vcmask 261120
    %v50 = vsel %vm49, %v47, 0.0
    %51 = vadd.xlane.f32.xlu0 %v50
    %v52 = vpop.xlane.xlu0 %51
    %v53 = vsel %vm49, %v48, 0.0
    %54 = vadd.xlane.f32.xlu0 %v53
    %v55 = vpop.xlane.xlu0 %54
    %v56 = vrcp.pop 32.0
    %v57 = vmul.f32 %v52, %v56
    %v58 = vmul.f32 %v55, %v56
    %v59 = vsub.f32 %v47, %v57
    %v60 = vsub.f32 %v48, %v58
    %v61 = vmul.f32 %v59, %v59
    %v62 = vmul.f32 %v60, %v60
    %v63 = vsel %vm49, %v61, 0.0
    %64 = vadd.xlane.f32.xlu0 %v63
    %v65 = vpop.xlane.xlu0 %64
    %v66 = vsel %vm49, %v62, 0.0
    %67 = vadd.xlane.f32.xlu0 %v66
    %v68 = vpop.xlane.xlu0 %67
    %v69 = vmul.f32 %v65, %v56
    %v70 = vmul.f32 %v68, %v56
    %v71 = vadd.f32 %v69, 1e-05
    %v72 = vadd.f32 %v70, 1e-05
    %v73 = vrsqrt.pop %v71
    %v74 = vrsqrt.pop %v72
    %v75 = vmul.f32 %v59, %v73
    %v76 = vmul.f32 %v60, %v74
    %v77 = vld [vmem:[%s1] sm:$0x1]
    %v79 = vlaneseq
    %v80 = vshrl.u32 %v79, 7
    %v81 = vsub.s32 0, %v80
    %v82 = vrot.slane %v77, %v81
    %v84 = vmul.f32 %v75, %v82
    %v85 = vmul.f32 %v76, %v82
    %v86 = vld [vmem:[%s2] sm:$0x1]
    %v88 = vlaneseq
    %v89 = vshrl.u32 %v88, 7
    %v90 = vsub.s32 0, %v89
    %v91 = vrot.slane %v86, %v90
    %v93 = vadd.f32 %v84, %v91
    %v94 = vadd.f32 %v85, %v91
    %v95 = vpack.c.bf16 %v94, %v93
    %v96 = vld [vmem:[#allocation5] sm:$0xf]
    %v97 = vld [vmem:[#allocation5 + $0x4] sm:$0xf]
    %v98 = vld [vmem:[#allocation5 + $0x8] sm:$0xf]
    %v99 = vld [vmem:[#allocation5 + $0xc] sm:$0xf]
    %v104 = vunpack.c.l.b16 %v96
    %v105 = vunpack.c.l.b16 %v97
    %v106 = vunpack.c.l.b16 %v98
    %v107 = vunpack.c.l.b16 %v99
    %v108 = vpack.c.b16 %v105, %v104
    %v109 = vpack.c.b16 %v107, %v106
    %v113 = vsel %vm49, %v95, 0
    %115 = vmatprep.subr.bf16.mxu0 0
    %116 = vmatpush1.bf16.msra.mxu0 %v108
    %117 = vmatprep.subr.bf16.mxu0 0
    %118 = vmatpush1.bf16.msra.mxu0 %v109
    %119 = vmatprep.subr.bf16.mxu0 0
    %120 = vmatpush1.bf16.msra.mxu0 0
    %121 = vmatprep.subr.bf16.mxu0 0
    %122 = vmatpush1.bf16.msra.mxu0 0
    %123 = vmatprep.subr.bf16.mxu0 0
    %124 = vmatpush1.bf16.msra.mxu0 0
    %125 = vmatprep.subr.bf16.mxu0 0
    %126 = vmatpush1.bf16.msra.mxu0 0
    %127 = vmatprep.subr.bf16.mxu0 0
    %128 = vmatpush1.bf16.msra.mxu0 0
    %129 = vmatprep.subr.bf16.mxu0 0
    %130 = vmatpush1.bf16.msra.mxu0 0
    %131 = vmatprep.subr.bf16.mxu0 0
    %132 = vmatpush1.bf16.msra.mxu0 0
    %133 = vmatprep.subr.bf16.mxu0 0
    %134 = vmatpush1.bf16.msra.mxu0 0
    %135 = vmatprep.subr.bf16.mxu0 0
    %136 = vmatpush1.bf16.msra.mxu0 0
    %137 = vmatprep.subr.bf16.mxu0 0
    %138 = vmatpush1.bf16.msra.mxu0 0
    %139 = vmatprep.subr.bf16.mxu0 0
    %140 = vmatpush1.bf16.msra.mxu0 0
    %141 = vmatprep.subr.bf16.mxu0 0
    %142 = vmatpush1.bf16.msra.mxu0 0
    %143 = vmatprep.subr.bf16.mxu0 0
    %144 = vmatpush1.bf16.msra.mxu0 0
    %145 = vmatprep.subr.bf16.mxu0 0
    %146 = vmatpush1.bf16.msra.mxu0 0
    %147 = vmatprep.mubr.bf16.mxu0 0
    %148 = vmatmul.mubr.bf16.gmra.mrb[0].mxu0 %v113
    %v149 = vpop.f32.mrb[0].mxu0
    %v150 = vadd.f32 0.0, %v149
    %v151 = vpop.f32.mrb[0].mxu0
    %v152 = vpop.f32.mrb[0].mxu0
    %v153 = vadd.f32 0.0, %v152
    %v154 = vpop.f32.mrb[0].mxu0
    %155 = vdwg.mxu0
    %v156 = vpack.c.bf16 %v153, %v150
    %v158 = vunpack.c.l.b16 %v156
    %v159 = vunpack.c.h.b16 %v156
    %v160 = vpack.c.b16 %v158, %v158
    %v161 = vpack.c.b16 %v159, %v159
    %vm164 = vcmask 781312
    %165 = vst.msk [vmem:[#allocation7] sm:$0xf] %vm164, %v160
    %166 = vst.msk [vmem:[#allocation7 + $0x4] sm:$0xf] %vm164, %v161
    // Predicated region
    $region26: #{tpu_custom_call.1} parent=1 // pred_check
      _
    $region27: #{tpu_custom_call.1} parent=1 // pred_check_branch
      %168 = sbr.rel (0) target = $region29
    $region28: #{tpu_custom_call.1} parent=1 // pred_region
      %s170 = ssub.s32 128, 128
      %171 = vsyncadd [#allocation4], %s170
      %s172 = sshll.u32 [#allocation7], 4
      %s173 = int_to_ptr.vmem [resolvable:$true] %s172
      %178 = dma.vmem_to_hbm [thread:$0]  %s173, 128, %s4, [#allocation4], 64, 64, 4
    $region29: #{tpu_custom_call.1} parent=1 // pred_fallthru
      _
    // Predicated region
    $region30: #{tpu_custom_call.1} parent=1 // pred_check
      _
    $region31: #{tpu_custom_call.1} parent=1 // pred_check_branch
      %180 = sbr.rel (0) target = $region33
    $region32: #{tpu_custom_call.1} parent=1 // pred_region
      %181 = dma.done [#allocation4], 128
    $region33: #{tpu_custom_call.1} parent=1 // pred_fallthru
      _
    %182 = vsyncpa [#allocation3], 1
    %183 = vsyncpa [#allocation6], 1
    %184 = vsyncpa [#allocation4], 1

</llo_original>
